<compile_context>
chip_gen: v6e
topology: v6e:2x2x1
jax: 0.10.0
libtpu: 0.0.40
codegen_flags: <defaults>
</compile_context>

<pallas_src>
import functools
from typing import NamedTuple

import jax
import jax.numpy as jnp
from jax.experimental import pallas as pl
from jax.experimental.pallas import tpu as pltpu


# Tile targets.  Worst-case VMEM for the matmul kernel:
#   2*(TM*TK + TK*TN + TN)*4B (double-buffered inputs) + TM*TN*4B (acc)
#   + 2*TM*TN*4B (out)  ~= 5 MiB   -> safe on v5e/v6e (128 MiB) and v7x (64 MiB)
_TM_TARGET = 256
_TN_TARGET = 256
_TK_TARGET = 512


def _round_up(x, m):
    return ((x + m - 1) // m) * m


def _tile_and_pad(dim, target, align):
    """Pick a tile (multiple of `align`, <= target unless dim forces it) and
    the padded dim it divides evenly."""
    full = _round_up(dim, align)
    tile = min(target, full)
    return tile, _round_up(dim, tile)


def _kn_tiling(d_in, d_out):
    tk, k_p = _tile_and_pad(d_in, _TK_TARGET, 128)    # K is a lane/sublane dim
    tn, n_p = _tile_and_pad(d_out, _TN_TARGET, 128)   # N is the output lane dim
    return tk, k_p, tn, n_p


class PreparedExperts(NamedTuple):
    w_t: jax.Array   # (E, K_p, N_p) f32: transposed + zero-padded expert weights
    b: jax.Array     # (E, N_p)      f32: zero-padded expert biases
    d_in: int
    d_out: int


def prepare_experts(expert_weights, expert_biases):
    """One-time preprocessing (cache across forward calls).

    Transposes the torch nn.Linear layout (E, D_out, D_in) -> (E, D_in, D_out)
    and zero-pads the matmul dims so kernels see lane-dense, (8,128)-friendly
    tiles.  Doing this once keeps a full HBM read+write of every expert's
    weights out of the per-call forward path."""
    e, d_out, d_in = expert_weights.shape
    _, k_p, _, n_p = _kn_tiling(d_in, d_out)
    w_t = jnp.transpose(expert_weights, (0, 2, 1)).astype(jnp.float32)
    w_t = jnp.pad(w_t, ((0, 0), (0, k_p - d_in), (0, n_p - d_out)))
    b = jnp.pad(expert_biases.astype(jnp.float32), ((0, 0), (0, n_p - d_out)))
    return PreparedExperts(w_t=w_t, b=b, d_in=d_in, d_out=d_out)


# ----------------------------------------------------------------------------
# Kernel 1: soup the expert weights once per forward.
# ----------------------------------------------------------------------------
def _soup_weights_kernel(probs_ref, w_ref, o_ref, *, num_experts):
    """probs_ref: SMEM (E,) f32 softmax probabilities.
       w_ref:     VMEM (E, TK, TN) f32 expert weight tiles.
       o_ref:     VMEM (TK, TN) compute dtype souped weight tile."""
    acc = probs_ref[0] * w_ref[0]                       # souping stays in f32
    for e in range(1, num_experts):
        acc = acc + probs_ref[e] * w_ref[e]
    o_ref[...] = acc.astype(o_ref.dtype)


def _soup_weights(probs, w_t, tk, tn, compute_dtype):
    e, k_p, n_p = w_t.shape
    return pl.pallas_call(
        functools.partial(_soup_weights_kernel, num_experts=e),
        out_shape=jax.ShapeDtypeStruct((k_p, n_p), compute_dtype),
        grid=(k_p // tk, n_p // tn),
        in_specs=[
            pl.BlockSpec(memory_space=pltpu.MemorySpace.SMEM),     # probs
            pl.BlockSpec((e, tk, tn), lambda i, j: (0, i, j)),     # expert W
        ],
        out_specs=pl.BlockSpec((tk, tn), lambda i, j: (i, j)),
        compiler_params=pltpu.CompilerParams(
            dimension_semantics=("parallel", "parallel")),
    )(probs, w_t)


# ----------------------------------------------------------------------------
# Kernel 2: tiled linear  y = x @ W_c + b_c  with f32 accumulator.
# ----------------------------------------------------------------------------
def _souped_linear_kernel(x_ref, w_ref, b_ref, o_ref, acc_ref):
    k = pl.program_id(2)

    @pl.when(k == 0)
    def _():
        acc_ref[...] = jnp.zeros_like(acc_ref)

    acc_ref[...] += jnp.dot(x_ref[...], w_ref[...],
                            preferred_element_type=jnp.float32)

    @pl.when(k == pl.num_programs(2) - 1)
    def _():
        # Bias only once, in the finalize branch.
        o_ref[...] = (acc_ref[...] + b_ref[...]).astype(o_ref.dtype)


def _souped_linear(x2, w_c, b_c, out_dtype, tm, tn, tk):
    m_p, k_p = x2.shape
    _, n_p = w_c.shape
    x_bytes = jnp.dtype(x2.dtype).itemsize
    w_bytes = jnp.dtype(w_c.dtype).itemsize
    o_bytes = jnp.dtype(out_dtype).itemsize
    return pl.pallas_call(
        _souped_linear_kernel,
        out_shape=jax.ShapeDtypeStruct((m_p, n_p), out_dtype),
        grid=(m_p // tm, n_p // tn, k_p // tk),
        in_specs=[
            pl.BlockSpec((tm, tk), lambda i, j, k: (i, k)),   # x tile
            pl.BlockSpec((tk, tn), lambda i, j, k: (k, j)),   # souped W tile
            pl.BlockSpec((1, tn), lambda i, j, k: (0, j)),    # souped bias tile
        ],
        out_specs=pl.BlockSpec((tm, tn), lambda i, j, k: (i, j)),
        scratch_shapes=[pltpu.VMEM((tm, tn), jnp.float32)],
        compiler_params=pltpu.CompilerParams(
            dimension_semantics=("parallel", "parallel", "arbitrary")),
        cost_estimate=pl.CostEstimate(
            flops=2 * m_p * n_p * k_p,
            transcendentals=0,
            bytes_accessed=(m_p * k_p * x_bytes + k_p * n_p * w_bytes
                            + n_p * 4 + m_p * n_p * o_bytes)),
    )(x2, w_c, b_c)


# ----------------------------------------------------------------------------
# Forward wrapper (inference_level == 3 path of MixtureSoup).
# ----------------------------------------------------------------------------
def mixture_soup_forward(x, prepared, expert_scores, *,
                         compute_dtype=jnp.float32):
    """x: (B, S, D_in); prepared: PreparedExperts; expert_scores: (E,) raw.
    Returns (B, S, D_out) in x.dtype."""
    b_dim, s_dim, d_in = x.shape
    assert d_in == prepared.d_in
    d_out = prepared.d_out
    _, k_p, n_p = prepared.w_t.shape
    tk, k_p2, tn, n_p2 = _kn_tiling(d_in, d_out)
    assert (k_p, n_p) == (k_p2, n_p2)

    m = b_dim * s_dim
    tm, m_p = _tile_and_pad(m, _TM_TARGET, 16)

    # Numerically stable softmax over the E (tiny) expert scores.
    probs = jax.nn.softmax(expert_scores.astype(jnp.float32))

    # Soup weights ONCE (Pallas); the matmul then streams 1x weight HBM bytes.
    w_c = _soup_weights(probs, prepared.w_t, tk, tn, compute_dtype)
    # Bias soup is E * D_out elements -> negligible; keep in f32.
    b_c = jnp.einsum("e,eo->o", probs, prepared.b).reshape(1, n_p)

    x2 = x.reshape(m, d_in).astype(compute_dtype)
    x2 = jnp.pad(x2, ((0, m_p - m), (0, k_p - d_in)))

    out = _souped_linear(x2, w_c, b_c, x.dtype, tm, tn, tk)
    return out[:m, :d_out].reshape(b_dim, s_dim, d_out)


def _reference(x, expert_weights, expert_biases, expert_scores):
    w = jax.nn.softmax(expert_scores)                               # (E,)
    w_c = jnp.einsum("e,eoi->oi", w, expert_weights)                # (D_out, D_in)
    b_c = jnp.einsum("e,eo->o", w, expert_biases)                   # (D_out,)
    return jnp.einsum("bsi,oi->bso", x, w_c) + b_c


if __name__ == "__main__":
    # Small shapes: batch=2, seq=8, hidden_in=32, hidden_out=32, experts=4.
    B, S, D_IN, D_OUT, E = 2, 8, 32, 32, 4

    key = jax.random.PRNGKey(0)
    kx, kw, kb, ks = jax.random.split(key, 4)

    x = jax.random.normal(kx, (B, S, D_IN), dtype=jnp.float32)
    # Deterministic "expert" parameters (each expert = nn.Linear(D_IN, D_OUT)).
    expert_weights = jax.random.normal(kw, (E, D_OUT, D_IN), dtype=jnp.float32) * 0.05
    expert_biases = jax.random.normal(kb, (E, D_OUT), dtype=jnp.float32) * 0.05
    # expert_score_weight ~ torch.rand(E)  -> uniform [0, 1)
    expert_scores = jax.random.uniform(ks, (E,), dtype=jnp.float32)

    prepared = prepare_experts(expert_weights, expert_biases)
    ref = _reference(x, expert_weights, expert_biases, expert_scores)

    # f32 MXU path (tight correctness check).
    out = mixture_soup_forward(x, prepared, expert_scores,
                               compute_dtype=jnp.float32)
    out = jax.block_until_ready(out)
    assert out.shape == (B, S, D_OUT)
    assert jnp.allclose(out, ref, atol=1e-4, rtol=1e-4)

    # bf16 MXU path (the fast path on v5e/v6e/v7x; f32 accumulation).
    out_bf16 = mixture_soup_forward(x, prepared, expert_scores,
                                    compute_dtype=jnp.bfloat16)
    out_bf16 = jax.block_until_ready(out_bf16)
    assert out_bf16.shape == (B, S, D_OUT)
    assert jnp.allclose(out_bf16, ref, atol=3e-2, rtol=3e-2)

    print("KERNEL_OK")
</pallas_src>

<mosaic_0001>
module attributes {stable_mosaic.version = 11 : i64} {
  func.func @_soup_weights_kernel(%arg0: i32, %arg1: i32, %arg2: memref<4xf32, #tpu.memory_space<smem>>, %arg3: memref<4x128x128xf32, #tpu.memory_space<vmem>>, %arg4: memref<128x128xf32, #tpu.memory_space<vmem>>) attributes {dimension_semantics = [#tpu.dimension_semantics<parallel>, #tpu.dimension_semantics<parallel>], iteration_bounds = array<i64: 1, 1>, scalar_prefetch = 0 : i64, scratch_operands = 0 : i64, tpu.core_type = #tpu.core_type<tc>, window_params = [{transform_indices = @transform_0, window_bounds = array<i64: 4>}, {transform_indices = @transform_1, window_bounds = array<i64: 4, 128, 128>}, {transform_indices = @transform_2, window_bounds = array<i64: 128, 128>}]} {
    %c0 = arith.constant 0 : index
    %0 = memref.load %arg2[%c0] : memref<4xf32, #tpu.memory_space<smem>>
    %c0_0 = arith.constant 0 : index
    %c0_1 = arith.constant 0 : index
    %c0_2 = arith.constant 0 : index
    %1 = vector.load %arg3[%c0_0, %c0_1, %c0_2] : memref<4x128x128xf32, #tpu.memory_space<vmem>>, vector<1x128x128xf32>
    %2 = vector.shape_cast %1 : vector<1x128x128xf32> to vector<128x128xf32>
    %3 = vector.broadcast %0 : f32 to vector<128x128xf32>
    %4 = arith.mulf %3, %2 : vector<128x128xf32>
    %c1 = arith.constant 1 : index
    %5 = memref.load %arg2[%c1] : memref<4xf32, #tpu.memory_space<smem>>
    %c1_3 = arith.constant 1 : index
    %c0_4 = arith.constant 0 : index
    %c0_5 = arith.constant 0 : index
    %6 = vector.load %arg3[%c1_3, %c0_4, %c0_5] : memref<4x128x128xf32, #tpu.memory_space<vmem>>, vector<1x128x128xf32>
    %7 = vector.shape_cast %6 : vector<1x128x128xf32> to vector<128x128xf32>
    %8 = vector.broadcast %5 : f32 to vector<128x128xf32>
    %9 = arith.mulf %8, %7 : vector<128x128xf32>
    %10 = arith.addf %4, %9 : vector<128x128xf32>
    %c2 = arith.constant 2 : index
    %11 = memref.load %arg2[%c2] : memref<4xf32, #tpu.memory_space<smem>>
    %c2_6 = arith.constant 2 : index
    %c0_7 = arith.constant 0 : index
    %c0_8 = arith.constant 0 : index
    %12 = vector.load %arg3[%c2_6, %c0_7, %c0_8] : memref<4x128x128xf32, #tpu.memory_space<vmem>>, vector<1x128x128xf32>
    %13 = vector.shape_cast %12 : vector<1x128x128xf32> to vector<128x128xf32>
    %14 = vector.broadcast %11 : f32 to vector<128x128xf32>
    %15 = arith.mulf %14, %13 : vector<128x128xf32>
    %16 = arith.addf %10, %15 : vector<128x128xf32>
    %c3 = arith.constant 3 : index
    %17 = memref.load %arg2[%c3] : memref<4xf32, #tpu.memory_space<smem>>
    %c3_9 = arith.constant 3 : index
    %c0_10 = arith.constant 0 : index
    %c0_11 = arith.constant 0 : index
    %18 = vector.load %arg3[%c3_9, %c0_10, %c0_11] : memref<4x128x128xf32, #tpu.memory_space<vmem>>, vector<1x128x128xf32>
    %19 = vector.shape_cast %18 : vector<1x128x128xf32> to vector<128x128xf32>
    %20 = vector.broadcast %17 : f32 to vector<128x128xf32>
    %21 = arith.mulf %20, %19 : vector<128x128xf32>
    %22 = arith.addf %16, %21 : vector<128x128xf32>
    %c0_12 = arith.constant 0 : index
    %c0_13 = arith.constant 0 : index
    %23 = vector.load %arg4[%c0_12, %c0_13] : memref<128x128xf32, #tpu.memory_space<vmem>>, vector<128x128xf32>
    tpu.vector_store %arg4[%c0_12, %c0_13], %22 {strides = array<i32>} : memref<128x128xf32, #tpu.memory_space<vmem>>, vector<128x128xf32>,
    return
  }
  func.func @transform_0(%arg0: i32, %arg1: i32) -> i32 {
    %c0_i32 = arith.constant 0 : i32
    %c0_i32_0 = arith.constant 0 : i32
    return %c0_i32 : i32
  }
  func.func @transform_1(%arg0: i32, %arg1: i32) -> (i32, i32, i32) {
    %c0_i32 = arith.constant 0 : i32
    %c0_i32_0 = arith.constant 0 : i32
    return %c0_i32, %arg0, %arg1 : i32, i32, i32
  }
  func.func @transform_2(%arg0: i32, %arg1: i32) -> (i32, i32) {
    %c0_i32 = arith.constant 0 : i32
    return %arg0, %arg1 : i32, i32
  }
}

</mosaic_0001>

<llo_original>
// kernel: tpu_custom_call.1
$region0: #{tpu_custom_call.1}
  #allocation0 [shape = 'u32[]', space=smem, size = 0x4, offset = 0x4, fixed_abs, tag = 'smem constant byte address 0x4 - core index']
  #allocation1 [shape = 'u32[144,128]{1,0:T(1,128)}', space=vmem, size = 0x12000, scoped, tag = 'internal scratch']
  %s0 = inlined_call_operand.hbm [shape: f32[4], index: 0, kind: input, shape index: {}]
  %s1 = inlined_call_operand.hbm [shape: f32[4,128,128], index: 1, kind: input, shape index: {}]
  %s2 = inlined_call_operand.hbm [shape: f32[128,128], index: 2, kind: output, shape index: {}]
  %s3 = sld [smem:[#allocation0]]
  $region26: #{tpu_custom_call.1} parent=0
    _
  %s5 = ssub.s32 1, %s3
  %s6 = scalar_select 0, %s5, %s3
  $region1: #{tpu_custom_call.1} parent=0
    #allocation2 [shape = 'u8[512]{0}', space=smem, size = 0x200, scoped, tag = 'input window, operand 0, single buffered']
    #allocation3 [shape = 's32[1]{0}', space=sflag, size = 0x4, scoped, tag = 'scoped memory for tpu_custom_call.1']
    #allocation4 [shape = 's32[1]{0}', space=sflag, size = 0x4, scoped, tag = 'scoped memory for tpu_custom_call.1']
    #allocation5 [shape = 's32[1]{0}', space=sflag, size = 0x4, scoped, tag = 'scoped memory for tpu_custom_call.1']
    #allocation6 [shape = 'u8[262144]{0}', space=vmem, size = 0x40000, scoped, tag = 'input window, operand 1, single buffered']
    #allocation7 [shape = 'u8[65536]{0}', space=vmem, size = 0x10000, scoped, tag = 'output window, operand 0, single buffered']
    %7 = vsyncpa [#allocation5], 0
    %8 = vsyncpa [#allocation3], 0
    %9 = vsyncpa [#allocation4], 0
    // Predicated region
    $region2: #{tpu_custom_call.1} parent=1 // pred_check
      _
    $region3: #{tpu_custom_call.1} parent=1 // pred_check_branch
      %11 = sbr.rel (0) target = $region5
    $region4: #{tpu_custom_call.1} parent=1 // pred_region
      %s13 = ssub.s32 16, 16
      %14 = vsyncadd [#allocation5], %s13
      %17 = dma.hbm_to_smem %s0, 16, [#allocation2], [#allocation5]
    $region5: #{tpu_custom_call.1} parent=1 // pred_fallthru
      _
    // Predicated region
    $region6: #{tpu_custom_call.1} parent=1 // pred_check
      _
    $region7: #{tpu_custom_call.1} parent=1 // pred_check_branch
      %19 = sbr.rel (0) target = $region9
    $region8: #{tpu_custom_call.1} parent=1 // pred_region
      %s21 = ssub.s32 8192, 8192
      %22 = vsyncadd [#allocation3], %s21
      %s23 = sshll.u32 [#allocation6], 4
      %s24 = int_to_ptr.vmem [resolvable:$true] %s23
      %29 = dma.hbm_to_vmem [thread:$0]  %s1, 8192, %s24, [#allocation3], 128, 128, 8
    $region9: #{tpu_custom_call.1} parent=1 // pred_fallthru
      _
    // Predicated region
    $region10: #{tpu_custom_call.1} parent=1 // pred_check
      _
    $region11: #{tpu_custom_call.1} parent=1 // pred_check_branch
      %31 = sbr.rel (0) target = $region13
    $region12: #{tpu_custom_call.1} parent=1 // pred_region
      %32 = dma.done [#allocation5], 16
    $region13: #{tpu_custom_call.1} parent=1 // pred_fallthru
      _
    // Predicated region
    $region14: #{tpu_custom_call.1} parent=1 // pred_check
      _
    $region15: #{tpu_custom_call.1} parent=1 // pred_check_branch
      %34 = sbr.rel (0) target = $region17
    $region16: #{tpu_custom_call.1} parent=1 // pred_region
      %35 = dma.done [#allocation3], 8192
    $region17: #{tpu_custom_call.1} parent=1 // pred_fallthru
      _
    %36 = sfence
    %s37 = sld [smem:[#allocation2]]
    %v38 = vld [vmem:[#allocation6] sm:$0xff]
    %v39 = vld [vmem:[#allocation6 + $0x8] sm:$0xff]
    %v40 = vld [vmem:[#allocation6 + $0x10] sm:$0xff]
    %v41 = vld [vmem:[#allocation6 + $0x18] sm:$0xff]
    %v42 = vld [vmem:[#allocation6 + $0x20] sm:$0xff]
    %v43 = vld [vmem:[#allocation6 + $0x28] sm:$0xff]
    %v44 = vld [vmem:[#allocation6 + $0x30] sm:$0xff]
    %v45 = vld [vmem:[#allocation6 + $0x38] sm:$0xff]
    %v46 = vld [vmem:[#allocation6 + $0x40] sm:$0xff]
    %v47 = vld [vmem:[#allocation6 + $0x48] sm:$0xff]
    %v48 = vld [vmem:[#allocation6 + $0x50] sm:$0xff]
    %v49 = vld [vmem:[#allocation6 + $0x58] sm:$0xff]
    %v50 = vld [vmem:[#allocation6 + $0x60] sm:$0xff]
    %v51 = vld [vmem:[#allocation6 + $0x68] sm:$0xff]
    %v52 = vld [vmem:[#allocation6 + $0x70] sm:$0xff]
    %v53 = vld [vmem:[#allocation6 + $0x78] sm:$0xff]
    %v54 = vstv %s37
    %v55 = vmul.f32 %v54, %v38
    %v56 = vmul.f32 %v54, %v39
    %v57 = vmul.f32 %v54, %v40
    %v58 = vmul.f32 %v54, %v41
    %v59 = vmul.f32 %v54, %v42
    %v60 = vmul.f32 %v54, %v43
    %v61 = vmul.f32 %v54, %v44
    %v62 = vmul.f32 %v54, %v45
    %v63 = vmul.f32 %v54, %v46
    %v64 = vmul.f32 %v54, %v47
    %v65 = vmul.f32 %v54, %v48
    %v66 = vmul.f32 %v54, %v49
    %v67 = vmul.f32 %v54, %v50
    %v68 = vmul.f32 %v54, %v51
    %v69 = vmul.f32 %v54, %v52
    %v70 = vmul.f32 %v54, %v53
    %s71 = sld [smem:[#allocation2 + $0x1]]
    %s72 = scalar_lea.vmem [#allocation6], 128
    %v73 = vld [vmem:[%s72] sm:$0xff]
    %v74 = vld [vmem:[%s72 + $0x8] sm:$0xff]
    %v75 = vld [vmem:[%s72 + $0x10] sm:$0xff]
    %v76 = vld [vmem:[%s72 + $0x18] sm:$0xff]
    %v77 = vld [vmem:[%s72 + $0x20] sm:$0xff]
    %v78 = vld [vmem:[%s72 + $0x28] sm:$0xff]
    %v79 = vld [vmem:[%s72 + $0x30] sm:$0xff]
    %v80 = vld [vmem:[%s72 + $0x38] sm:$0xff]
    %v81 = vld [vmem:[%s72 + $0x40] sm:$0xff]
    %v82 = vld [vmem:[%s72 + $0x48] sm:$0xff]
    %v83 = vld [vmem:[%s72 + $0x50] sm:$0xff]
    %v84 = vld [vmem:[%s72 + $0x58] sm:$0xff]
    %v85 = vld [vmem:[%s72 + $0x60] sm:$0xff]
    %v86 = vld [vmem:[%s72 + $0x68] sm:$0xff]
    %v87 = vld [vmem:[%s72 + $0x70] sm:$0xff]
    %v88 = vld [vmem:[%s72 + $0x78] sm:$0xff]
    %v89 = vstv %s71
    %v90 = vmul.f32 %v89, %v73
    %v91 = vmul.f32 %v89, %v74
    %v92 = vmul.f32 %v89, %v75
    %v93 = vmul.f32 %v89, %v76
    %v94 = vmul.f32 %v89, %v77
    %v95 = vmul.f32 %v89, %v78
    %v96 = vmul.f32 %v89, %v79
    %v97 = vmul.f32 %v89, %v80
    %v98 = vmul.f32 %v89, %v81
    %v99 = vmul.f32 %v89, %v82
    %v100 = vmul.f32 %v89, %v83
    %v101 = vmul.f32 %v89, %v84
    %v102 = vmul.f32 %v89, %v85
    %v103 = vmul.f32 %v89, %v86
    %v104 = vmul.f32 %v89, %v87
    %v105 = vmul.f32 %v89, %v88
    %v106 = vadd.f32 %v55, %v90
    %v107 = vadd.f32 %v56, %v91
    %v108 = vadd.f32 %v57, %v92
    %v109 = vadd.f32 %v58, %v93
    %v110 = vadd.f32 %v59, %v94
    %v111 = vadd.f32 %v60, %v95
    %v112 = vadd.f32 %v61, %v96
    %v113 = vadd.f32 %v62, %v97
    %v114 = vadd.f32 %v63, %v98
    %v115 = vadd.f32 %v64, %v99
    %v116 = vadd.f32 %v65, %v100
    %v117 = vadd.f32 %v66, %v101
    %v118 = vadd.f32 %v67, %v102
    %v119 = vadd.f32 %v68, %v103
    %v120 = vadd.f32 %v69, %v104
    %v121 = vadd.f32 %v70, %v105
    %s122 = sld [smem:[#allocation2 + $0x2]]
    %s123 = scalar_lea.vmem [#allocation6], 256
    %v124 = vld [vmem:[%s123] sm:$0xff]
    %v125 = vld [vmem:[%s123 + $0x8] sm:$0xff]
    %v126 = vld [vmem:[%s123 + $0x10] sm:$0xff]
    %v127 = vld [vmem:[%s123 + $0x18] sm:$0xff]
    %v128 = vld [vmem:[%s123 + $0x20] sm:$0xff]
    %v129 = vld [vmem:[%s123 + $0x28] sm:$0xff]
    %v130 = vld [vmem:[%s123 + $0x30] sm:$0xff]
    %v131 = vld [vmem:[%s123 + $0x38] sm:$0xff]
    %v132 = vld [vmem:[%s123 + $0x40] sm:$0xff]
    %v133 = vld [vmem:[%s123 + $0x48] sm:$0xff]
    %v134 = vld [vmem:[%s123 + $0x50] sm:$0xff]
    %v135 = vld [vmem:[%s123 + $0x58] sm:$0xff]
    %v136 = vld [vmem:[%s123 + $0x60] sm:$0xff]
    %v137 = vld [vmem:[%s123 + $0x68] sm:$0xff]
    %v138 = vld [vmem:[%s123 + $0x70] sm:$0xff]
    %v139 = vld [vmem:[%s123 + $0x78] sm:$0xff]
    %v140 = vstv %s122
    %v141 = vmul.f32 %v140, %v124
    %v142 = vmul.f32 %v140, %v125
    %v143 = vmul.f32 %v140, %v126
    %v144 = vmul.f32 %v140, %v127
    %v145 = vmul.f32 %v140, %v128
    %v146 = vmul.f32 %v140, %v129
    %v147 = vmul.f32 %v140, %v130
    %v148 = vmul.f32 %v140, %v131
    %v149 = vmul.f32 %v140, %v132
    %v150 = vmul.f32 %v140, %v133
    %v151 = vmul.f32 %v140, %v134
    %v152 = vmul.f32 %v140, %v135
    %v153 = vmul.f32 %v140, %v136
    %v154 = vmul.f32 %v140, %v137
    %v155 = vmul.f32 %v140, %v138
    %v156 = vmul.f32 %v140, %v139
    %v157 = vadd.f32 %v106, %v141
    %v158 = vadd.f32 %v107, %v142
    %v159 = vadd.f32 %v108, %v143
    %v160 = vadd.f32 %v109, %v144
    %v161 = vadd.f32 %v110, %v145
    %v162 = vadd.f32 %v111, %v146
    %v163 = vadd.f32 %v112, %v147
    %v164 = vadd.f32 %v113, %v148
    %v165 = vadd.f32 %v114, %v149
    %v166 = vadd.f32 %v115, %v150
    %v167 = vadd.f32 %v116, %v151
    %v168 = vadd.f32 %v117, %v152
    %v169 = vadd.f32 %v118, %v153
    %v170 = vadd.f32 %v119, %v154
    %v171 = vadd.f32 %v120, %v155
    %v172 = vadd.f32 %v121, %v156
    %s173 = sld [smem:[#allocation2 + $0x3]]
    %s174 = scalar_lea.vmem [#allocation6], 384
    %v175 = vld [vmem:[%s174] sm:$0xff]
    %v176 = vld [vmem:[%s174 + $0x8] sm:$0xff]
    %v177 = vld [vmem:[%s174 + $0x10] sm:$0xff]
    %v178 = vld [vmem:[%s174 + $0x18] sm:$0xff]
    %v179 = vld [vmem:[%s174 + $0x20] sm:$0xff]
    %v180 = vld [vmem:[%s174 + $0x28] sm:$0xff]
    %v181 = vld [vmem:[%s174 + $0x30] sm:$0xff]
    %v182 = vld [vmem:[%s174 + $0x38] sm:$0xff]
    %v183 = vld [vmem:[%s174 + $0x40] sm:$0xff]
    %v184 = vld [vmem:[%s174 + $0x48] sm:$0xff]
    %v185 = vld [vmem:[%s174 + $0x50] sm:$0xff]
    %v186 = vld [vmem:[%s174 + $0x58] sm:$0xff]
    %v187 = vld [vmem:[%s174 + $0x60] sm:$0xff]
    %v188 = vld [vmem:[%s174 + $0x68] sm:$0xff]
    %v189 = vld [vmem:[%s174 + $0x70] sm:$0xff]
    %v190 = vld [vmem:[%s174 + $0x78] sm:$0xff]
    %v191 = vstv %s173
    %v192 = vmul.f32 %v191, %v175
    %v193 = vmul.f32 %v191, %v176
    %v194 = vmul.f32 %v191, %v177
    %v195 = vmul.f32 %v191, %v178
    %v196 = vmul.f32 %v191, %v179
    %v197 = vmul.f32 %v191, %v180
    %v198 = vmul.f32 %v191, %v181
    %v199 = vmul.f32 %v191, %v182
    %v200 = vmul.f32 %v191, %v183
    %v201 = vmul.f32 %v191, %v184
    %v202 = vmul.f32 %v191, %v185
    %v203 = vmul.f32 %v191, %v186
    %v204 = vmul.f32 %v191, %v187
    %v205 = vmul.f32 %v191, %v188
    %v206 = vmul.f32 %v191, %v189
    %v207 = vmul.f32 %v191, %v190
    %v208 = vadd.f32 %v157, %v192
    %v209 = vadd.f32 %v158, %v193
    %v210 = vadd.f32 %v159, %v194
    %v211 = vadd.f32 %v160, %v195
    %v212 = vadd.f32 %v161, %v196
    %v213 = vadd.f32 %v162, %v197
    %v214 = vadd.f32 %v163, %v198
    %v215 = vadd.f32 %v164, %v199
    %v216 = vadd.f32 %v165, %v200
    %v217 = vadd.f32 %v166, %v201
    %v218 = vadd.f32 %v167, %v202
    %v219 = vadd.f32 %v168, %v203
    %v220 = vadd.f32 %v169, %v204
    %v221 = vadd.f32 %v170, %v205
    %v222 = vadd.f32 %v171, %v206
    %v223 = vadd.f32 %v172, %v207
    %224 = vst [vmem:[#allocation7] sm:$0xff] %v208
    %225 = vst [vmem:[#allocation7 + $0x8] sm:$0xff] %v209
    %226 = vst [vmem:[#allocation7 + $0x10] sm:$0xff] %v210
    %227 = vst [vmem:[#allocation7 + $0x18] sm:$0xff] %v211
    %228 = vst [vmem:[#allocation7 + $0x20] sm:$0xff] %v212
    %229 = vst [vmem:[#allocation7 + $0x28] sm:$0xff] %v213
    %230 = vst [vmem:[#allocation7 + $0x30] sm:$0xff] %v214
    %231 = vst [vmem:[#allocation7 + $0x38] sm:$0xff] %v215
    %232 = vst [vmem:[#allocation7 + $0x40] sm:$0xff] %v216
    %233 = vst [vmem:[#allocation7 + $0x48] sm:$0xff] %v217
    %234 = vst [vmem:[#allocation7 + $0x50] sm:$0xff] %v218
    %235 = vst [vmem:[#allocation7 + $0x58] sm:$0xff] %v219
    %236 = vst [vmem:[#allocation7 + $0x60] sm:$0xff] %v220
    %237 = vst [vmem:[#allocation7 + $0x68] sm:$0xff] %v221
    %238 = vst [vmem:[#allocation7 + $0x70] sm:$0xff] %v222
    %239 = vst [vmem:[#allocation7 + $0x78] sm:$0xff] %v223
    // Predicated region
    $region18: #{tpu_custom_call.1} parent=1 // pred_check
      _
    $region19: #{tpu_custom_call.1} parent=1 // pred_check_branch
      %241 = sbr.rel (0) target = $region21
    $region20: #{tpu_custom_call.1} parent=1 // pred_region
      %s243 = ssub.s32 2048, 2048
      %244 = vsyncadd [#allocation4], %s243
      %s245 = sshll.u32 [#allocation7], 4
      %s246 = int_to_ptr.vmem [resolvable:$true] %s245
      %251 = dma.vmem_to_hbm [thread:$0]  %s246, 2048, %s2, [#allocation4], 128, 128, 8
    $region21: #{tpu_custom_call.1} parent=1 // pred_fallthru
      _
    // Predicated region
    $region22: #{tpu_custom_call.1} parent=1 // pred_check
      _
    $region23: #{tpu_custom_call.1} parent=1 // pred_check_branch
      %253 = sbr.rel (0) target = $region25
    $region24: #{tpu_custom_call.1} parent=1 // pred_region
      %254 = dma.done [#allocation4], 2048
    $region25: #{tpu_custom_call.1} parent=1 // pred_fallthru
      _
    %255 = vsyncpa [#allocation3], 1
    %256 = vsyncpa [#allocation4], 1
    %257 = vsyncpa [#allocation5], 1

</llo_original>
